<compile_context>
chip_gen: v5e
topology: v5e:2x2
jax: 0.10.0
libtpu: 0.0.40
codegen_flags: <defaults>
</compile_context>

<pallas_src>
import jax
import jax.numpy as jnp
from jax.experimental import pallas as pl
from jax.experimental.pallas import tpu as pltpu


def _dynamic_alignment_loss_kernel(inv_temp_ref, t_ref, i_ref, out_ref):
    """One grid step == one (B, D) text/image instance; writes out_ref[n]."""
    n = pl.program_id(0)
    inv_temp = inv_temp_ref[0]

    mm_dtype = t_ref.dtype                       # do NOT up-cast MXU operands
    t = t_ref[0].astype(jnp.float32)             # (B, D)  f32 for VPU/EUP math
    im = i_ref[0].astype(jnp.float32)            # (B, D)
    B = t.shape[0]

    # ---- F.normalize(x, dim=1): x * rsqrt(max(||x||^2, 1e-24))  (EUP rsqrt, no div) ----
    t_row_sq = jnp.sum(t * t, axis=1, keepdims=True)          # (B, 1)
    i_row_sq = jnp.sum(im * im, axis=1, keepdims=True)        # (B, 1)
    tn = t * jax.lax.rsqrt(jnp.maximum(t_row_sq, 1e-24))
    inn = im * jax.lax.rsqrt(jnp.maximum(i_row_sq, 1e-24))

    # ---- logits = (tn @ inn^T) * inv_temp  (MXU trans-B contraction, no transpose) ----
    # Operands stay in the input dtype (bf16 in -> bf16 MXU passes); f32 accumulate.
    logits = jax.lax.dot_general(
        tn.astype(mm_dtype), inn.astype(mm_dtype),
        dimension_numbers=(((1,), (1,)), ((), ())),
        preferred_element_type=jnp.float32,
    ) * inv_temp                                               # (B, B)

    # ---- matching-pair logits straight off the logits diagonal (O(B^2); consistent
    #      with the MXU accumulate instead of recomputing sum(tn*inn) on the VPU) ----
    eye = (jax.lax.broadcasted_iota(jnp.int32, (B, B), 0)
           == jax.lax.broadcasted_iota(jnp.int32, (B, B), 1))
    mean_diag = jnp.sum(jnp.where(eye, logits, 0.0)) * (1.0 / B)

    # ---- bidirectional cross-entropy with ONE shared exp ----
    # A single global max shift is valid for both the row and the column logsumexp,
    # so both directions share one (B,B) exp pass on the EUP.
    m = jnp.max(logits)                                        # scalar global max
    e = jnp.exp(logits - m)                                    # (B, B) shared exp
    lse_row = jnp.log(jnp.sum(e, axis=1, keepdims=True))       # (B, 1)
    lse_col = jnp.log(jnp.sum(e, axis=0, keepdims=True))       # (1, B)
    loss_t2i = m + jnp.mean(lse_row) - mean_diag
    loss_i2t = m + jnp.mean(lse_col) - mean_diag
    base_loss = 0.5 * (loss_t2i + loss_i2t)
    # TODO(synk): for B >~ 1-2k, tile the (B,B) logits (flash-style online row/col
    # LSE with pl.when finalize) so the quadratic temporary never lives in VMEM
    # (mandatory on v7x's 64 MiB; avoids the 32 MiB scoped default on v6e).

    # ---- torch.var(x, dim=0) unbiased, .mean() over features — two-pass (stable,
    #      squares are nonnegative so the variance cannot go negative) ----
    inv_B = 1.0 / B
    inv_Bm1 = 1.0 / (B - 1)
    t_c = t - jnp.sum(t, axis=0, keepdims=True) * inv_B        # centered (B, D)
    i_c = im - jnp.sum(im, axis=0, keepdims=True) * inv_B
    text_var = jnp.mean(jnp.sum(t_c * t_c, axis=0, keepdims=True)) * inv_Bm1
    image_var = jnp.mean(jnp.sum(i_c * i_c, axis=0, keepdims=True)) * inv_Bm1
    # TODO(synk): at large B, route the axis=0 (batch) sums and the lse_col sum
    # through the MXU as ones(1,B) @ X -- the extended slot sits idle after the
    # tiny similarity matmul while the XLU becomes the saturating unit (v6e/v7x).

    w = text_var / (text_var + image_var + 1e-8)
    out_ref[n] = w * loss_t2i + (1.0 - w) * loss_i2t + base_loss


def dynamic_alignment_loss_batched(text_emb, image_emb, temperature=0.07):
    """Stacked instances: text_emb/image_emb are (N, B, D); returns (N,) losses."""
    assert text_emb.shape == image_emb.shape and text_emb.ndim == 3
    N, B, D = text_emb.shape
    assert B >= 2, "unbiased variance requires batch >= 2"

    # Runtime scalar in SMEM so a learnable / changing temperature never recompiles.
    inv_temp = jnp.full((1,), 1.0 / temperature, dtype=jnp.float32)

    itemsize = jnp.dtype(text_emb.dtype).itemsize
    cost = pl.CostEstimate(
        flops=int(N * (2 * B * B * D + 10 * B * D + 8 * B * B)),
        transcendentals=int(N * (B * B + 4 * B)),
        bytes_accessed=int(2 * N * B * D * itemsize + 4 * N + 4),
    )

    # TODO(synk): for lane-density at tiny D (<128), pack k instances per grid step
    # as a (B, k*D) slab for the pointwise/normalize/variance stages (per-instance
    # matmuls stay separate); skipped here to keep the layout simple.
    losses = pl.pallas_call(
        _dynamic_alignment_loss_kernel,
        out_shape=jax.ShapeDtypeStruct((N,), jnp.float32),
        grid=(N,),
        in_specs=[
            pl.BlockSpec(memory_space=pltpu.SMEM),            # inv_temp (1,) scalar
            pl.BlockSpec((1, B, D), lambda n: (n, 0, 0)),      # text  block (VMEM)
            pl.BlockSpec((1, B, D), lambda n: (n, 0, 0)),      # image block (VMEM)
        ],
        # The whole (N,) loss vector lives in SMEM and is revisited every grid step
        # (each step writes only its own element) -> grid axis must be "arbitrary".
        out_specs=pl.BlockSpec(memory_space=pltpu.SMEM),
        compiler_params=pltpu.CompilerParams(
            dimension_semantics=("arbitrary",),
        ),
        cost_estimate=cost,
    )(inv_temp, text_emb, image_emb)
    return losses


def dynamic_alignment_loss(text_emb, image_emb, temperature=0.07):
    """Single-instance API matching the PyTorch module: (B, D), (B, D) -> scalar."""
    assert text_emb.shape == image_emb.shape and text_emb.ndim == 2
    # TODO(synk): forward-only (pallas_call has no autodiff); wrap in jax.custom_vjp
    # (or fall back to the pure-JAX reference for the backward) if used in training.
    return dynamic_alignment_loss_batched(
        text_emb[None], image_emb[None], temperature)[0]


def _reference_loss(text_emb, image_emb, temperature=0.07):
    # Pure-JAX reference mirroring the PyTorch module exactly.
    t = text_emb.astype(jnp.float32)
    im = image_emb.astype(jnp.float32)
    tn = t / jnp.maximum(jnp.linalg.norm(t, axis=1, keepdims=True), 1e-12)
    inn = im / jnp.maximum(jnp.linalg.norm(im, axis=1, keepdims=True), 1e-12)
    logits = tn @ inn.T / temperature
    B = t.shape[0]
    labels = jnp.arange(B)

    def ce(lg):
        lse = jax.scipy.special.logsumexp(lg, axis=1)
        return jnp.mean(lse - lg[jnp.arange(B), labels])

    l_t2i = ce(logits)
    l_i2t = ce(logits.T)
    base = 0.5 * (l_t2i + l_i2t)
    tv = jnp.mean(jnp.var(t, axis=0, ddof=1))
    iv = jnp.mean(jnp.var(im, axis=0, ddof=1))
    w = tv / (tv + iv + 1e-8)
    return w * l_t2i + (1.0 - w) * l_i2t + base


if __name__ == "__main__":
    B, D = 8, 32
    key = jax.random.PRNGKey(0)
    k1, k2, k3, k4 = jax.random.split(key, 4)

    # --- single-instance (module-equivalent) path ---
    text_emb = jax.random.normal(k1, (B, D), dtype=jnp.float32)
    image_emb = jax.random.normal(k2, (B, D), dtype=jnp.float32)
    loss = jax.block_until_ready(dynamic_alignment_loss(text_emb, image_emb, 0.07))
    ref = _reference_loss(text_emb, image_emb, 0.07)
    assert jnp.allclose(loss, ref, rtol=1e-4, atol=1e-4), (loss, ref)

    # --- batched path (grid over instances, one pallas_call) ---
    N = 4
    t_b = jax.random.normal(k3, (N, B, D), dtype=jnp.float32)
    i_b = jax.random.normal(k4, (N, B, D), dtype=jnp.float32)
    losses = jax.block_until_ready(dynamic_alignment_loss_batched(t_b, i_b, 0.07))
    refs = jnp.stack([_reference_loss(t_b[n], i_b[n], 0.07) for n in range(N)])
    assert jnp.allclose(losses, refs, rtol=1e-4, atol=1e-4), (losses, refs)

    print("KERNEL_OK")
</pallas_src>

<mosaic_0001>
module attributes {stable_mosaic.version = 11 : i64} {
  func.func @_dynamic_alignment_loss_kernel(%arg0: i32, %arg1: memref<1xf32, #tpu.memory_space<smem>>, %arg2: memref<1x8x32xf32, #tpu.memory_space<vmem>>, %arg3: memref<1x8x32xf32, #tpu.memory_space<vmem>>, %arg4: memref<1xf32, #tpu.memory_space<smem>>) attributes {dimension_semantics = [#tpu.dimension_semantics<arbitrary>], iteration_bounds = array<i64: 1>, scalar_prefetch = 0 : i64, scratch_operands = 0 : i64, tpu.core_type = #tpu.core_type<tc>, window_params = [{transform_indices = @transform_0, window_bounds = array<i64: 1>}, {transform_indices = @transform_1, window_bounds = array<i64: 1, 8, 32>}, {transform_indices = @transform_2, window_bounds = array<i64: 1, 8, 32>}, {transform_indices = @transform_3, window_bounds = array<i64: 1>}]} {
    %c0 = arith.constant 0 : index
    %0 = memref.load %arg1[%c0] : memref<1xf32, #tpu.memory_space<smem>>
    %c0_0 = arith.constant 0 : index
    %c0_1 = arith.constant 0 : index
    %c0_2 = arith.constant 0 : index
    %1 = vector.load %arg2[%c0_0, %c0_1, %c0_2] : memref<1x8x32xf32, #tpu.memory_space<vmem>>, vector<1x8x32xf32>
    %2 = vector.shape_cast %1 : vector<1x8x32xf32> to vector<8x32xf32>
    %c0_3 = arith.constant 0 : index
    %c0_4 = arith.constant 0 : index
    %c0_5 = arith.constant 0 : index
    %3 = vector.load %arg3[%c0_3, %c0_4, %c0_5] : memref<1x8x32xf32, #tpu.memory_space<vmem>>, vector<1x8x32xf32>
    %4 = vector.shape_cast %3 : vector<1x8x32xf32> to vector<8x32xf32>
    %5 = arith.mulf %2, %2 : vector<8x32xf32>
    %cst = arith.constant dense<0.000000e+00> : vector<8xf32>
    %6 = vector.multi_reduction <add>, %5, %cst [1] : vector<8x32xf32> to vector<8xf32>
    %7 = vector.shape_cast %6 : vector<8xf32> to vector<8x1xf32>
    %8 = arith.mulf %4, %4 : vector<8x32xf32>
    %cst_6 = arith.constant dense<0.000000e+00> : vector<8xf32>
    %9 = vector.multi_reduction <add>, %8, %cst_6 [1] : vector<8x32xf32> to vector<8xf32>
    %10 = vector.shape_cast %9 : vector<8xf32> to vector<8x1xf32>
    %cst_7 = arith.constant 1.000000e-24 : f32
    %11 = vector.broadcast %cst_7 : f32 to vector<8x1xf32>
    %12 = arith.maximumf %7, %11 : vector<8x1xf32>
    %13 = math.rsqrt %12 : vector<8x1xf32>
    %14 = vector.broadcast %13 : vector<8x1xf32> to vector<8x32xf32>
    %15 = arith.mulf %2, %14 : vector<8x32xf32>
    %cst_8 = arith.constant 1.000000e-24 : f32
    %16 = vector.broadcast %cst_8 : f32 to vector<8x1xf32>
    %17 = arith.maximumf %10, %16 : vector<8x1xf32>
    %18 = math.rsqrt %17 : vector<8x1xf32>
    %19 = vector.broadcast %18 : vector<8x1xf32> to vector<8x32xf32>
    %20 = arith.mulf %4, %19 : vector<8x32xf32>
    %cst_9 = arith.constant dense<0.000000e+00> : vector<8x8xf32>
    %21 = tpu.matmul %15, %20, %cst_9 {dimension_numbers = #tpu.dot_dimension_numbers<[1], [1], [0], [0], [0, 0, 1, 0], [], []>} : vector<8x32xf32>, vector<8x32xf32>, vector<8x8xf32> -> vector<8x8xf32>
    %22 = vector.broadcast %0 : f32 to vector<8x8xf32>
    %23 = arith.mulf %21, %22 : vector<8x8xf32>
    %24 = tpu.iota {dimensions = array<i32: 0>} : vector<8x8xi32>
    %25 = tpu.iota {dimensions = array<i32: 1>} : vector<8x8xi32>
    %26 = arith.cmpi eq, %24, %25 : vector<8x8xi32>
    %cst_10 = arith.constant 0.000000e+00 : f32
    %27 = vector.broadcast %cst_10 : f32 to vector<8x8xf32>
    %28 = arith.select %26, %23, %27 : vector<8x8xi1>, vector<8x8xf32>
    %29 = vector.shape_cast %28 : vector<8x8xf32> to vector<1x8x8xf32>
    %cst_11 = arith.constant dense<0.000000e+00> : vector<1xf32>
    %30 = vector.multi_reduction <add>, %29, %cst_11 [1, 2] : vector<1x8x8xf32> to vector<1xf32>
    %31 = vector.shape_cast %30 : vector<1xf32> to vector<1x1x1xf32>
    %32 = vector.extract %31[0, 0, 0] : f32 from vector<1x1x1xf32>
    %cst_12 = arith.constant 1.250000e-01 : f32
    %33 = arith.mulf %32, %cst_12 : f32
    %34 = vector.shape_cast %23 : vector<8x8xf32> to vector<1x8x8xf32>
    %cst_13 = arith.constant dense<0xFF800000> : vector<1xf32>
    %35 = vector.multi_reduction <maximumf>, %34, %cst_13 [1, 2] : vector<1x8x8xf32> to vector<1xf32>
    %36 = vector.shape_cast %35 : vector<1xf32> to vector<1x1x1xf32>
    %37 = vector.extract %36[0, 0, 0] : f32 from vector<1x1x1xf32>
    %38 = vector.broadcast %37 : f32 to vector<8x8xf32>
    %39 = arith.subf %23, %38 : vector<8x8xf32>
    %40 = math.exp %39 : vector<8x8xf32>
    %cst_14 = arith.constant dense<0.000000e+00> : vector<8xf32>
    %41 = vector.multi_reduction <add>, %40, %cst_14 [1] : vector<8x8xf32> to vector<8xf32>
    %42 = vector.shape_cast %41 : vector<8xf32> to vector<8x1xf32>
    %43 = math.log %42 : vector<8x1xf32>
    %cst_15 = arith.constant dense<0.000000e+00> : vector<8xf32>
    %44 = vector.multi_reduction <add>, %40, %cst_15 [0] : vector<8x8xf32> to vector<8xf32>
    %45 = vector.shape_cast %44 : vector<8xf32> to vector<1x8xf32>
    %46 = math.log %45 : vector<1x8xf32>
    %47 = vector.shape_cast %43 : vector<8x1xf32> to vector<1x8x1xf32>
    %cst_16 = arith.constant dense<0.000000e+00> : vector<1xf32>
    %48 = vector.multi_reduction <add>, %47, %cst_16 [1, 2] : vector<1x8x1xf32> to vector<1xf32>
    %49 = vector.shape_cast %48 : vector<1xf32> to vector<1x1x1xf32>
    %50 = vector.extract %49[0, 0, 0] : f32 from vector<1x1x1xf32>
    %cst_17 = arith.constant 8.000000e+00 : f32
    %51 = arith.divf %50, %cst_17 : f32
    %52 = arith.addf %37, %51 : f32
    %53 = arith.subf %52, %33 : f32
    %54 = vector.shape_cast %46 : vector<1x8xf32> to vector<1x1x8xf32>
    %cst_18 = arith.constant dense<0.000000e+00> : vector<1xf32>
    %55 = vector.multi_reduction <add>, %54, %cst_18 [1, 2] : vector<1x1x8xf32> to vector<1xf32>
    %56 = vector.shape_cast %55 : vector<1xf32> to vector<1x1x1xf32>
    %57 = vector.extract %56[0, 0, 0] : f32 from vector<1x1x1xf32>
    %cst_19 = arith.constant 8.000000e+00 : f32
    %58 = arith.divf %57, %cst_19 : f32
    %59 = arith.addf %37, %58 : f32
    %60 = arith.subf %59, %33 : f32
    %61 = arith.addf %53, %60 : f32
    %cst_20 = arith.constant 5.000000e-01 : f32
    %62 = arith.mulf %cst_20, %61 : f32
    %cst_21 = arith.constant dense<0.000000e+00> : vector<32xf32>
    %63 = vector.multi_reduction <add>, %2, %cst_21 [0] : vector<8x32xf32> to vector<32xf32>
    %64 = vector.shape_cast %63 : vector<32xf32> to vector<1x32xf32>
    %cst_22 = arith.constant 1.250000e-01 : f32
    %65 = vector.broadcast %cst_22 : f32 to vector<1x32xf32>
    %66 = arith.mulf %64, %65 : vector<1x32xf32>
    %67 = vector.broadcast %66 : vector<1x32xf32> to vector<8x32xf32>
    %68 = arith.subf %2, %67 : vector<8x32xf32>
    %cst_23 = arith.constant dense<0.000000e+00> : vector<32xf32>
    %69 = vector.multi_reduction <add>, %4, %cst_23 [0] : vector<8x32xf32> to vector<32xf32>
    %70 = vector.shape_cast %69 : vector<32xf32> to vector<1x32xf32>
    %cst_24 = arith.constant 1.250000e-01 : f32
    %71 = vector.broadcast %cst_24 : f32 to vector<1x32xf32>
    %72 = arith.mulf %70, %71 : vector<1x32xf32>
    %73 = vector.broadcast %72 : vector<1x32xf32> to vector<8x32xf32>
    %74 = arith.subf %4, %73 : vector<8x32xf32>
    %75 = arith.mulf %68, %68 : vector<8x32xf32>
    %cst_25 = arith.constant dense<0.000000e+00> : vector<32xf32>
    %76 = vector.multi_reduction <add>, %75, %cst_25 [0] : vector<8x32xf32> to vector<32xf32>
    %77 = vector.shape_cast %76 : vector<32xf32> to vector<1x32xf32>
    %78 = vector.shape_cast %77 : vector<1x32xf32> to vector<1x1x32xf32>
    %cst_26 = arith.constant dense<0.000000e+00> : vector<1xf32>
    %79 = vector.multi_reduction <add>, %78, %cst_26 [1, 2] : vector<1x1x32xf32> to vector<1xf32>
    %80 = vector.shape_cast %79 : vector<1xf32> to vector<1x1x1xf32>
    %81 = vector.extract %80[0, 0, 0] : f32 from vector<1x1x1xf32>
    %cst_27 = arith.constant 3.200000e+01 : f32
    %82 = arith.divf %81, %cst_27 : f32
    %cst_28 = arith.constant 0.142857149 : f32
    %83 = arith.mulf %82, %cst_28 : f32
    %84 = arith.mulf %74, %74 : vector<8x32xf32>
    %cst_29 = arith.constant dense<0.000000e+00> : vector<32xf32>
    %85 = vector.multi_reduction <add>, %84, %cst_29 [0] : vector<8x32xf32> to vector<32xf32>
    %86 = vector.shape_cast %85 : vector<32xf32> to vector<1x32xf32>
    %87 = vector.shape_cast %86 : vector<1x32xf32> to vector<1x1x32xf32>
    %cst_30 = arith.constant dense<0.000000e+00> : vector<1xf32>
    %88 = vector.multi_reduction <add>, %87, %cst_30 [1, 2] : vector<1x1x32xf32> to vector<1xf32>
    %89 = vector.shape_cast %88 : vector<1xf32> to vector<1x1x1xf32>
    %90 = vector.extract %89[0, 0, 0] : f32 from vector<1x1x1xf32>
    %cst_31 = arith.constant 3.200000e+01 : f32
    %91 = arith.divf %90, %cst_31 : f32
    %cst_32 = arith.constant 0.142857149 : f32
    %92 = arith.mulf %91, %cst_32 : f32
    %93 = arith.addf %83, %92 : f32
    %cst_33 = arith.constant 9.99999993E-9 : f32
    %94 = arith.addf %93, %cst_33 : f32
    %95 = arith.divf %83, %94 : f32
    %96 = arith.mulf %95, %53 : f32
    %cst_34 = arith.constant 1.000000e+00 : f32
    %97 = arith.subf %cst_34, %95 : f32
    %98 = arith.mulf %97, %60 : f32
    %99 = arith.addf %96, %98 : f32
    %100 = arith.addf %99, %62 : f32
    %101 = arith.index_cast %arg0 : i32 to index
    %102 = memref.load %arg4[%101] : memref<1xf32, #tpu.memory_space<smem>>
    memref.store %100, %arg4[%101] : memref<1xf32, #tpu.memory_space<smem>>
    return
  }
  func.func @transform_0(%arg0: i32) -> i32 {
    %c0_i32 = arith.constant 0 : i32
    %c0_i32_0 = arith.constant 0 : i32
    return %c0_i32 : i32
  }
  func.func @transform_1(%arg0: i32) -> (i32, i32, i32) {
    %c0_i32 = arith.constant 0 : i32
    %c0_i32_0 = arith.constant 0 : i32
    %c0_i32_1 = arith.constant 0 : i32
    return %arg0, %c0_i32, %c0_i32_0 : i32, i32, i32
  }
  func.func @transform_2(%arg0: i32) -> (i32, i32, i32) {
    %c0_i32 = arith.constant 0 : i32
    %c0_i32_0 = arith.constant 0 : i32
    %c0_i32_1 = arith.constant 0 : i32
    return %arg0, %c0_i32, %c0_i32_0 : i32, i32, i32
  }
  func.func @transform_3(%arg0: i32) -> i32 {
    %c0_i32 = arith.constant 0 : i32
    %c0_i32_0 = arith.constant 0 : i32
    return %c0_i32 : i32
  }
}

</mosaic_0001>

<llo_original>
// kernel: tpu_custom_call.1
$region0: #{tpu_custom_call.1}
  #allocation0 [shape = 'u32[]', space=smem, size = 0x4, offset = 0x4, fixed_abs, tag = 'smem constant byte address 0x4 - core index']
  #allocation1 [shape = 'u32[72,128]{1,0:T(1,128)}', space=vmem, size = 0x9000, scoped, tag = 'internal scratch']
  #allocation2 [shape = 'f32[1]{0:T(128)S(6)}', space=smem, size = 0x200, scoped, tag = 'scoped memory for tpu_custom_call.1']
  %s0 = inlined_call_operand.<no memory space> [shape: f32[1], index: 0, kind: input, shape index: {}]
  %s1 = inlined_call_operand.hbm [shape: f32[1,8,32], index: 1, kind: input, shape index: {}]
  %s2 = inlined_call_operand.hbm [shape: f32[1,8,32], index: 2, kind: input, shape index: {}]
  %s3 = inlined_call_operand.hbm [shape: f32[1], index: 3, kind: output, shape index: {}]
  %s4 = sld [smem:[#allocation0]]
  $region30: #{tpu_custom_call.1} parent=0
    _
  %s6 = ssub.s32 1, %s4
  %s7 = scalar_select 0, %s6, %s4
  %8 = sst [smem:[#allocation2]] %s0
  $region1: #{tpu_custom_call.1} parent=0
    #allocation3 [shape = 'u8[4096]{0}', space=vmem, size = 0x1000, scoped, tag = 'input window, operand 1, single buffered']
    #allocation4 [shape = 's32[1]{0}', space=sflag, size = 0x4, scoped, tag = 'scoped memory for tpu_custom_call.1']
    #allocation5 [shape = 's32[1]{0}', space=sflag, size = 0x4, scoped, tag = 'scoped memory for tpu_custom_call.1']
    #allocation6 [shape = 'u8[4096]{0}', space=vmem, size = 0x1000, scoped, tag = 'input window, operand 2, single buffered']
    #allocation7 [shape = 's32[1]{0}', space=sflag, size = 0x4, scoped, tag = 'scoped memory for tpu_custom_call.1']
    #allocation8 [shape = 'u8[512]{0}', space=smem, size = 0x200, scoped, tag = 'output window, operand 0, single buffered']
    %9 = vsyncpa [#allocation4], 0
    %10 = vsyncpa [#allocation7], 0
    %11 = vsyncpa [#allocation5], 0
    // Predicated region
    $region2: #{tpu_custom_call.1} parent=1 // pred_check
      _
    $region3: #{tpu_custom_call.1} parent=1 // pred_check_branch
      %13 = sbr.rel (0) target = $region5
    $region4: #{tpu_custom_call.1} parent=1 // pred_region
      _
    $region5: #{tpu_custom_call.1} parent=1 // pred_fallthru
      _
    // Predicated region
    $region6: #{tpu_custom_call.1} parent=1 // pred_check
      _
    $region7: #{tpu_custom_call.1} parent=1 // pred_check_branch
      %15 = sbr.rel (0) target = $region9
    $region8: #{tpu_custom_call.1} parent=1 // pred_region
      %17 = vsyncadd [#allocation4], 0
      %s19 = sshll.u32 %s1, 4
      %s20 = int_to_ptr.hbm [resolvable:$true] %s19
      %s21 = sshll.u32 [#allocation3], 4
      %s22 = int_to_ptr.vmem [resolvable:$true] %s21
      %24 = dma.hbm_to_vmem [thread:$0]  %s20, 128, %s22, [#allocation4]
    $region9: #{tpu_custom_call.1} parent=1 // pred_fallthru
      _
    // Predicated region
    $region10: #{tpu_custom_call.1} parent=1 // pred_check
      _
    $region11: #{tpu_custom_call.1} parent=1 // pred_check_branch
      %26 = sbr.rel (0) target = $region13
    $region12: #{tpu_custom_call.1} parent=1 // pred_region
      %28 = vsyncadd [#allocation7], 0
      %s30 = sshll.u32 %s2, 4
      %s31 = int_to_ptr.hbm [resolvable:$true] %s30
      %s32 = sshll.u32 [#allocation6], 4
      %s33 = int_to_ptr.vmem [resolvable:$true] %s32
      %35 = dma.hbm_to_vmem [thread:$0]  %s31, 128, %s33, [#allocation7]
    $region13: #{tpu_custom_call.1} parent=1 // pred_fallthru
      _
    // Predicated region
    $region14: #{tpu_custom_call.1} parent=1 // pred_check
      _
    $region15: #{tpu_custom_call.1} parent=1 // pred_check_branch
      %37 = sbr.rel (0) target = $region17
    $region16: #{tpu_custom_call.1} parent=1 // pred_region
      %39 = dma.done [#allocation4], 128
    $region17: #{tpu_custom_call.1} parent=1 // pred_fallthru
      _
    // Predicated region
    $region18: #{tpu_custom_call.1} parent=1 // pred_check
      _
    $region19: #{tpu_custom_call.1} parent=1 // pred_check_branch
      %41 = sbr.rel (0) target = $region21
    $region20: #{tpu_custom_call.1} parent=1 // pred_region
      %43 = dma.done [#allocation7], 128
    $region21: #{tpu_custom_call.1} parent=1 // pred_fallthru
      _
    %s44 = sld [smem:[#allocation2]]
    %v45 = vld [vmem:[#allocation3] sm:$0xff]
    %v46 = vld [vmem:[#allocation6] sm:$0xff]
    %v47 = vmul.f32 %v45, %v45
    %vm48 = vcmask 261120
    %v49 = vsel %vm48, %v47, 0.0
    %50 = vadd.xlane.f32.xlu0 %v49
    %v51 = vpop.xlane.xlu0 %50
    %v52 = vmul.f32 %v46, %v46
    %v53 = vsel %vm48, %v52, 0.0
    %54 = vadd.xlane.f32.xlu0 %v53
    %v55 = vpop.xlane.xlu0 %54
    %v56 = vmax.f32 %v51, 1e-24
    %v57 = vrsqrt.pop %v56
    %v58 = vmul.f32 %v57, %v56
    %v59 = vmul.f32 %v58, %v57
    %v60 = vmul.f32 0.5, %v59
    %v61 = vsub.f32 1.5, %v60
    %v62 = vmul.f32 %v57, %v61
    %vm63 = vweird.f32 %v56
    %vm64 = vweird.f32 %v57
    %vm65 = vmor %vm63, %vm64
    %v66 = vsel %vm65, %v57, %v62
    %v67 = vmul.f32 %v45, %v66
    %v68 = vmax.f32 %v55, 1e-24
    %v69 = vrsqrt.pop %v68
    %v70 = vmul.f32 %v69, %v68
    %v71 = vmul.f32 %v70, %v69
    %v72 = vmul.f32 0.5, %v71
    %v73 = vsub.f32 1.5, %v72
    %v74 = vmul.f32 %v69, %v73
    %vm75 = vweird.f32 %v68
    %vm76 = vweird.f32 %v69
    %vm77 = vmor %vm75, %vm76
    %v78 = vsel %vm77, %v69, %v74
    %v79 = vmul.f32 %v46, %v78
    %v81 = vsel %vm48, %v67, 0
    %v84 = vsel %vm48, %v79, 0
    %86 = vmatpush.xpose.msra.mxu0 0.0
    %87 = vmatpush.xpose.msra.mxu0 0.0
    %88 = vmatpush.xpose.msra.mxu0 0.0
    %89 = vmatpush.xpose.msra.mxu0 0.0
    %90 = vmatpush.xpose.msra.mxu0 0.0
    %91 = vmatpush.xpose.msra.mxu0 0.0
    %92 = vmatpush.xpose.msra.mxu0 0.0
    %93 = vmatpush.xpose.msra.mxu0 0.0
    %94 = vmatpush.xpose.msra.mxu0 0.0
    %95 = vmatpush.xpose.msra.mxu0 0.0
    %96 = vmatpush.xpose.msra.mxu0 0.0
    %97 = vmatpush.xpose.msra.mxu0 0.0
    %98 = vmatpush.xpose.msra.mxu0 0.0
    %99 = vmatpush.xpose.msra.mxu0 0.0
    %100 = vmatpush.xpose.msra.mxu0 0.0
    %101 = vmatpush.xpose.msra.mxu0 %v84
    %102 = vmatmul.f32.gmra.mxu0 %v81
    %v103 = vpop.f32.mrf.mxu0
    %v104 = vadd.f32 0.0, %v103
    %105 = vdwg.mxu0
    %v106 = vstv %s44
    %v107 = vmul.f32 %v104, %v106
    %v108 = vlaneseq
    %v109 = vshrl.u32 %v108, 7
    %v110 = vlaneseq
    %v111 = vand.u32 %v110, 127
    %vm112 = vcmp.eq.s32.totalorder %v109, %v111
    %v113 = vsel %vm112, %v107, 0.0
    %vm114 = vcmask 64512
    %v115 = vsel %vm114, %v113, 0.0
    %116 = vadd.xlane.f32.xlu0 %v115
    %v117 = vpop.xlane.xlu0 %116
    %v118 = vrot.slane %v117, 4
    %v119 = vadd.f32 %v117, %v118
    %v120 = vrot.slane %v119, 2
    %v121 = vadd.f32 %v119, %v120
    %v122 = vrot.slane %v121, 1
    %v123 = vadd.f32 %v121, %v122
    %s124 = vtos %v123
    %s125 = smul.f32 %s124, 0.125
    %v126 = vsel %vm114, %v107, -inf
    %127 = vmax.xlane.f32.xlu0 %v126
    %v128 = vpop.xlane.xlu0 %127
    %v129 = vrot.slane %v128, 4
    %v130 = vmax.f32 %v128, %v129
    %v131 = vrot.slane %v130, 2
    %v132 = vmax.f32 %v130, %v131
    %v133 = vrot.slane %v132, 1
    %v134 = vmax.f32 %v132, %v133
    %s135 = vtos %v134
    %v136 = vstv %s135
    %v137 = vsub.f32 %v107, %v136
    %v138 = vmul.f32 %v137, 1.442695
    %v139 = vpow.pop %v138
    %v140 = vsel %vm114, %v139, 0.0
    %141 = vadd.xlane.f32.xlu0 %v140
    %v142 = vpop.xlane.xlu0 %141
    %v143 = vlog2.pop %v142
    %v144 = vmul.f32 %v143, 0.6931472
    %v145 = vrot.slane %v140, 4
    %v146 = vadd.f32 %v140, %v145
    %v147 = vrot.slane %v146, 2
    %v148 = vadd.f32 %v146, %v147
    %v149 = vrot.slane %v148, 1
    %v150 = vadd.f32 %v148, %v149
    %v151 = vlog2.pop %v150
    %v152 = vmul.f32 %v151, 0.6931472
    %vm153 = vcmask 7168
    %v154 = vsel %vm153, %v144, 0.0
    %155 = vadd.xlane.f32.xlu0 %v154
    %v156 = vpop.xlane.xlu0 %155
    %v157 = vrot.slane %v156, 4
    %v158 = vadd.f32 %v156, %v157
    %v159 = vrot.slane %v158, 2
    %v160 = vadd.f32 %v158, %v159
    %v161 = vrot.slane %v160, 1
    %v162 = vadd.f32 %v160, %v161
    %s163 = vtos %v162
    %v164 = vrcp.pop 8.0
    %v165 = vmul.f32 8.0, %v164
    %v166 = vsub.f32 1.0, %v165
    %v167 = vmul.f32 %v164, %v166
    %v168 = vadd.f32 %v164, %v167
    %vm169 = vweird.f32 %v164
    %v170 = vsel %vm169, %v164, %v168
    %s171 = vtos %v170
    %s172 = smul.f32 %s163, %s171
    %s173 = sadd.f32 %s135, %s172
    %s174 = ssub.f32 %s173, %s125
    %vm175 = vcmask 57344
    %v176 = vsel %vm175, %v152, 0.0
    %177 = vadd.xlane.f32.xlu0 %v176
    %v178 = vpop.xlane.xlu0 %177
    %v179 = vrot.slane %v178, 4
    %v180 = vadd.f32 %v178, %v179
    %v181 = vrot.slane %v180, 2
    %v182 = vadd.f32 %v180, %v181
    %v183 = vrot.slane %v182, 1
    %v184 = vadd.f32 %v182, %v183
    %s185 = vtos %v184
    %v186 = vrcp.pop 8.0
    %v187 = vmul.f32 8.0, %v186
    %v188 = vsub.f32 1.0, %v187
    %v189 = vmul.f32 %v186, %v188
    %v190 = vadd.f32 %v186, %v189
    %vm191 = vweird.f32 %v186
    %v192 = vsel %vm191, %v186, %v190
    %s193 = vtos %v192
    %s194 = smul.f32 %s185, %s193
    %s195 = sadd.f32 %s135, %s194
    %s196 = ssub.f32 %s195, %s125
    %s197 = sadd.f32 %s174, %s196
    %s198 = smul.f32 %s197, 0.5
    %v199 = vsel %vm48, %v45, 0.0
    %v200 = vrot.slane %v199, 4
    %v201 = vadd.f32 %v199, %v200
    %v202 = vrot.slane %v201, 2
    %v203 = vadd.f32 %v201, %v202
    %v204 = vrot.slane %v203, 1
    %v205 = vadd.f32 %v203, %v204
    %v206 = vmul.f32 %v205, 0.125
    %v207 = vsub.f32 %v45, %v206
    %v208 = vsel %vm48, %v46, 0.0
    %v209 = vrot.slane %v208, 4
    %v210 = vadd.f32 %v208, %v209
    %v211 = vrot.slane %v210, 2
    %v212 = vadd.f32 %v210, %v211
    %v213 = vrot.slane %v212, 1
    %v214 = vadd.f32 %v212, %v213
    %v215 = vmul.f32 %v214, 0.125
    %v216 = vsub.f32 %v46, %v215
    %v217 = vmul.f32 %v207, %v207
    %v218 = vsel %vm48, %v217, 0.0
    %v219 = vrot.slane %v218, 4
    %v220 = vadd.f32 %v218, %v219
    %v221 = vrot.slane %v220, 2
    %v222 = vadd.f32 %v220, %v221
    %v223 = vrot.slane %v222, 1
    %v224 = vadd.f32 %v222, %v223
    %vm225 = vcmask 253952
    %v226 = vsel %vm225, %v224, 0.0
    %227 = vadd.xlane.f32.xlu0 %v226
    %v228 = vpop.xlane.xlu0 %227
    %v229 = vrot.slane %v228, 4
    %v230 = vadd.f32 %v228, %v229
    %v231 = vrot.slane %v230, 2
    %v232 = vadd.f32 %v230, %v231
    %v233 = vrot.slane %v232, 1
    %v234 = vadd.f32 %v232, %v233
    %s235 = vtos %v234
    %v236 = vrcp.pop 32.0
    %v237 = vmul.f32 32.0, %v236
    %v238 = vsub.f32 1.0, %v237
    %v239 = vmul.f32 %v236, %v238
    %v240 = vadd.f32 %v236, %v239
    %vm241 = vweird.f32 %v236
    %v242 = vsel %vm241, %v236, %v240
    %s243 = vtos %v242
    %s244 = smul.f32 %s235, %s243
    %s245 = smul.f32 %s244, 0.14285715
    %v246 = vmul.f32 %v216, %v216
    %v247 = vsel %vm48, %v246, 0.0
    %v248 = vrot.slane %v247, 4
    %v249 = vadd.f32 %v247, %v248
    %v250 = vrot.slane %v249, 2
    %v251 = vadd.f32 %v249, %v250
    %v252 = vrot.slane %v251, 1
    %v253 = vadd.f32 %v251, %v252
    %v254 = vsel %vm225, %v253, 0.0
    %255 = vadd.xlane.f32.xlu0 %v254
    %v256 = vpop.xlane.xlu0 %255
    %v257 = vrot.slane %v256, 4
    %v258 = vadd.f32 %v256, %v257
    %v259 = vrot.slane %v258, 2
    %v260 = vadd.f32 %v258, %v259
    %v261 = vrot.slane %v260, 1
    %v262 = vadd.f32 %v260, %v261
    %s263 = vtos %v262
    %v264 = vrcp.pop 32.0
    %v265 = vmul.f32 32.0, %v264
    %v266 = vsub.f32 1.0, %v265
    %v267 = vmul.f32 %v264, %v266
    %v268 = vadd.f32 %v264, %v267
    %vm269 = vweird.f32 %v264
    %v270 = vsel %vm269, %v264, %v268
    %s271 = vtos %v270
    %s272 = smul.f32 %s263, %s271
    %s273 = smul.f32 %s272, 0.14285715
    %s274 = sadd.f32 %s245, %s273
    %s275 = sadd.f32 %s274, 1e-08
    %v276 = vstv %s275
    %v277 = vrcp.pop %v276
    %v278 = vmul.f32 %v276, %v277
    %v279 = vsub.f32 1.0, %v278
    %v280 = vmul.f32 %v277, %v279
    %v281 = vadd.f32 %v277, %v280
    %vm282 = vweird.f32 %v276
    %vm283 = vweird.f32 %v277
    %vm284 = vmor %vm282, %vm283
    %v285 = vsel %vm284, %v277, %v281
    %v286 = vand.u32 2147483647, %v276
    %vm287 = vcmp.eq.f32.partialorder %v286, 8.507059e+37
    %v288 = vand.u32 %v276, 2147483648
    %v289 = vor.u32 1.1754944e-38, %v288
    %v290 = vsel %vm287, %v289, %v285
    %s291 = vtos %v290
    %s292 = smul.f32 %s245, %s291
    %s293 = smul.f32 %s292, %s174
    %s294 = ssub.f32 1.0, %s292
    %s295 = smul.f32 %s294, %s196
    %s296 = sadd.f32 %s293, %s295
    %s297 = sadd.f32 %s296, %s198
    %s298 = scalar_lea.smem [#allocation8], 0
    %299 = sst [smem:[%s298]] %s297
    // Predicated region
    $region22: #{tpu_custom_call.1} parent=1 // pred_check
      _
    $region23: #{tpu_custom_call.1} parent=1 // pred_check_branch
      %301 = sbr.rel (0) target = $region25
    $region24: #{tpu_custom_call.1} parent=1 // pred_region
      %303 = vsyncadd [#allocation5], 0
      %s305 = sshll.u32 %s3, 4
      %s306 = int_to_ptr.hbm [resolvable:$true] %s305
      %308 = dma.smem_to_hbm [#allocation8], 16, %s306, [#allocation5]
    $region25: #{tpu_custom_call.1} parent=1 // pred_fallthru
      _
    // Predicated region
    $region26: #{tpu_custom_call.1} parent=1 // pred_check
      _
    $region27: #{tpu_custom_call.1} parent=1 // pred_check_branch
      %310 = sbr.rel (0) target = $region29
    $region28: #{tpu_custom_call.1} parent=1 // pred_region
      %312 = dma.done [#allocation5], 16
    $region29: #{tpu_custom_call.1} parent=1 // pred_fallthru
      _
    %313 = sfence
    %314 = vsyncpa [#allocation4], 1
    %315 = vsyncpa [#allocation7], 1
    %316 = vsyncpa [#allocation5], 1

</llo_original>
